<compile_context>
chip_gen: v7x
topology: tpu7x:2x2x1
jax: 0.10.0
libtpu: 0.0.40
codegen_flags: <defaults>
</compile_context>

<pallas_src>
import functools
import math

import jax
import jax.numpy as jnp
from jax.experimental import pallas as pl
from jax.experimental.pallas import tpu as pltpu


# ---------------------------------------------------------------------------
# Counter-based hash (pure jnp so it lowers on Mosaic TPU and in interpret mode).
# ---------------------------------------------------------------------------
def _hash_u32(idx_u32, seed_u32):
    """Mix a per-element index with a seed and avalanche (murmur-style finalizer)."""
    h = (idx_u32 * jnp.uint32(0x9E3779B9)
         + seed_u32 * jnp.uint32(0x85EBCA6B)
         + jnp.uint32(0x6A09E667))
    h = h ^ (h >> jnp.uint32(16))
    h = h * jnp.uint32(0x7FEB352D)
    h = h ^ (h >> jnp.uint32(15))
    h = h * jnp.uint32(0x846CA68B)
    h = h ^ (h >> jnp.uint32(16))
    return h


def _keep_threshold_u32(keep_prob):
    t = int(round(keep_prob * 4294967296.0))
    return max(0, min(t, 4294967295))


_TILE_ELEMS = 512 * 1024   # ~2 MiB/buffer in f32: double-buffered in+out = 8 MiB,
                           # fits the 16 MiB (v5e) / 32 MiB (v6e,v7x) scoped VMEM.
_FLAT_LANE = 1024          # lane-dense last dim when hidden is not 128-aligned


def _plan_layout(shape):
    """Choose a lane-dense 2-D layout and row tiling.

    Returns (rows, lane, pad_elems, block_rows, grid).
    """
    n = max(1, math.prod(shape))
    last = shape[-1] if len(shape) >= 1 else 1
    if last >= 128 and last % 128 == 0:
        lane = last                 # hidden already lane-dense: free reshape, no pad
        rows = n // lane
        pad = 0
    else:
        lane = _FLAT_LANE           # flatten + pad to a wide, multiple-of-128 slab
        rows = pl.cdiv(n, lane)
        pad = rows * lane - n
    block_rows = max(8, (_TILE_ELEMS // lane) // 8 * 8)
    if block_rows >= rows:
        block_rows = rows           # single full-extent block (always legal)
    grid = pl.cdiv(rows, block_rows)
    return rows, lane, pad, block_rows, grid


# ---------------------------------------------------------------------------
# Kernel: regenerate the Bernoulli(keep)/keep mask from (seed, global index)
# and apply it to the input tile.  Used for BOTH draw and reuse paths.
# ---------------------------------------------------------------------------
def _fraternal_kernel(seed_ref, x_ref, out_ref, *, threshold, scale):
    block_rows, lane = x_ref.shape
    base = pl.program_id(0) * block_rows                  # per-tile independence
    row = jax.lax.broadcasted_iota(jnp.int32, (block_rows, lane), 0) + base
    col = jax.lax.broadcasted_iota(jnp.int32, (block_rows, lane), 1)
    idx = (row * lane + col).astype(jnp.uint32)           # global row-major index
    bits = _hash_u32(idx, seed_ref[0].astype(jnp.uint32))
    keep = bits < jnp.uint32(threshold)                   # exact integer compare
    xf = x_ref[...].astype(jnp.float32)                   # scale in f32, cast once
    out_ref[...] = jnp.where(keep, xf * jnp.float32(scale),
                             jnp.float32(0.0)).astype(out_ref.dtype)


@functools.partial(jax.jit, static_argnames=("dropout",))
def _fraternal_apply(x, seed, *, dropout):
    orig_shape = x.shape
    n = x.size
    keep_prob = 1.0 - dropout
    threshold = _keep_threshold_u32(keep_prob)
    scale = 1.0 / keep_prob

    rows, lane, pad, block_rows, grid = _plan_layout(orig_shape)
    if pad:
        x2d = jnp.pad(x.reshape(-1), (0, pad)).reshape(rows, lane)
    else:
        x2d = x.reshape(rows, lane)

    kernel = functools.partial(_fraternal_kernel, threshold=threshold, scale=scale)
    # NOTE: no input_output_aliases on purpose — when the input already has the
    # 2-D slab shape the reshape can be a no-op view and aliasing would donate
    # the caller's buffer.
    out2d = pl.pallas_call(
        kernel,
        out_shape=jax.ShapeDtypeStruct((rows, lane), x.dtype),
        grid=(grid,),
        in_specs=[
            pl.BlockSpec(memory_space=pltpu.MemorySpace.SMEM),      # seed scalar
            pl.BlockSpec((block_rows, lane), lambda i: (i, 0)),     # x tile
        ],
        out_specs=pl.BlockSpec((block_rows, lane), lambda i: (i, 0)),
        compiler_params=pltpu.CompilerParams(
            dimension_semantics=("parallel",)),
    )(seed, x2d)

    if pad:
        return out2d.reshape(-1)[:n].reshape(orig_shape)
    return out2d.reshape(orig_shape)


def fraternal_mask_reference(shape, seed, dropout, dtype=jnp.float32):
    """Pure-JAX reference of the in-kernel mask (layout independent: the mask of an
    element depends only on its row-major position and the seed)."""
    n = math.prod(shape)
    keep_prob = 1.0 - dropout
    idx = jnp.arange(n, dtype=jnp.int32).astype(jnp.uint32)
    bits = _hash_u32(idx, jnp.asarray(seed).reshape(-1)[0].astype(jnp.uint32))
    keep = bits < jnp.uint32(_keep_threshold_u32(keep_prob))
    return jnp.where(keep, jnp.float32(1.0 / keep_prob),
                     jnp.float32(0.0)).astype(dtype).reshape(shape)


class FraternalDropout:
    """JAX/Pallas port of the PyTorch FraternalDropout module.

    Instead of materialising the mask in HBM (written on the draw path, re-read on
    the reuse path), only the PRNG seed is stored; both paths regenerate the mask
    on the fly inside the kernel.
    """

    def __init__(self, dropout=0.5):
        self.dropout = float(dropout)
        self.training = True
        self.mask_seed = None                         # replaces the torch `self.mask` buffer
        self._next_seed = jnp.array([1], jnp.int32)   # counter stays on device

    def __call__(self, draw_mask, x):
        if not self.training:
            return x
        if x.size == 0:
            return x
        if self.mask_seed is None or bool(draw_mask):
            self.mask_seed = self._next_seed
            self._next_seed = self._next_seed + 1
        return _fraternal_apply(x, self.mask_seed, dropout=self.dropout)

    def current_mask(self, shape, dtype=jnp.float32):
        """Materialise the currently stored mask (for inspection / tests)."""
        assert self.mask_seed is not None
        return fraternal_mask_reference(shape, self.mask_seed, self.dropout, dtype)


if __name__ == "__main__":
    # ---- small shape matching the module's (seq, batch, hidden) usage ----
    S, B, H = 8, 2, 32
    x = jax.random.normal(jax.random.PRNGKey(0), (S, B, H), dtype=jnp.float32)

    layer = FraternalDropout(dropout=0.5)

    # draw a fresh mask and apply it
    y1 = jax.block_until_ready(layer(True, x))

    # reuse the stored mask on a different input (draw_mask = False)
    x2 = jax.random.normal(jax.random.PRNGKey(1), (S, B, H), dtype=jnp.float32)
    y2 = jax.block_until_ready(layer(False, x2))

    mask = layer.current_mask(x.shape, x.dtype)
    scale = 1.0 / (1.0 - layer.dropout)
    assert bool(jnp.all((mask == 0.0) | (jnp.abs(mask - scale) < 1e-6)))
    assert bool(jnp.allclose(y1, mask * x, atol=1e-5))
    assert bool(jnp.allclose(y2, mask * x2, atol=1e-5))

    # ---- larger shape: exercises lane=H layout, multi-tile grid and ragged edge ----
    layer_big = FraternalDropout(dropout=0.25)
    xb = jax.random.normal(jax.random.PRNGKey(2), (640, 4, 256), dtype=jnp.float32)
    yb = jax.block_until_ready(layer_big(True, xb))
    mask_b = layer_big.current_mask(xb.shape, xb.dtype)
    assert bool(jnp.allclose(yb, mask_b * xb, atol=1e-5))
    keep_frac = float(jnp.mean(mask_b != 0.0))
    assert 0.70 < keep_frac < 0.80          # ~0.75 expected, very loose bound

    # reuse path on the big layer
    xb2 = jax.random.normal(jax.random.PRNGKey(3), xb.shape, dtype=jnp.float32)
    yb2 = jax.block_until_ready(layer_big(False, xb2))
    assert bool(jnp.allclose(yb2, mask_b * xb2, atol=1e-5))

    # ---- eval mode: identity ----
    layer.training = False
    y3 = jax.block_until_ready(layer(True, x))
    assert bool(jnp.allclose(y3, x))

    print("KERNEL_OK")
</pallas_src>

<mosaic_0001>
module attributes {stable_mosaic.version = 11 : i64} {
  func.func @_fraternal_kernel(%arg0: i32, %arg1: memref<1xi32, #tpu.memory_space<smem>>, %arg2: memref<1x1024xf32, #tpu.memory_space<vmem>>, %arg3: memref<1x1024xf32, #tpu.memory_space<vmem>>) attributes {dimension_semantics = [#tpu.dimension_semantics<parallel>], iteration_bounds = array<i64: 1>, scalar_prefetch = 0 : i64, scratch_operands = 0 : i64, tpu.core_type = #tpu.core_type<tc>, window_params = [{transform_indices = @transform_0, window_bounds = array<i64: 1>}, {transform_indices = @transform_1, window_bounds = array<i64: 1, 1024>}, {transform_indices = @transform_2, window_bounds = array<i64: 1, 1024>}]} {
    %c1_i32 = arith.constant 1 : i32
    %0 = arith.muli %arg0, %c1_i32 : i32
    %1 = tpu.iota {dimensions = array<i32: 0>} : vector<1x1024xi32>
    %2 = vector.broadcast %0 : i32 to vector<1x1024xi32>
    %3 = arith.addi %1, %2 : vector<1x1024xi32>
    %4 = tpu.iota {dimensions = array<i32: 1>} : vector<1x1024xi32>
    %c1024_i32 = arith.constant 1024 : i32
    %5 = vector.broadcast %c1024_i32 : i32 to vector<1x1024xi32>
    %6 = arith.muli %3, %5 : vector<1x1024xi32>
    %7 = arith.addi %6, %4 : vector<1x1024xi32>
    %c0 = arith.constant 0 : index
    %8 = memref.load %arg1[%c0] : memref<1xi32, #tpu.memory_space<smem>>
    %c-1640531527_i32 = arith.constant -1640531527 : i32
    %9 = vector.broadcast %c-1640531527_i32 : i32 to vector<1x1024xi32>
    %10 = arith.muli %7, %9 : vector<1x1024xi32>
    %c-2048144789_i32 = arith.constant -2048144789 : i32
    %11 = arith.muli %8, %c-2048144789_i32 : i32
    %12 = vector.broadcast %11 : i32 to vector<1x1024xi32>
    %13 = arith.addi %10, %12 : vector<1x1024xi32>
    %c1779033703_i32 = arith.constant 1779033703 : i32
    %14 = vector.broadcast %c1779033703_i32 : i32 to vector<1x1024xi32>
    %15 = arith.addi %13, %14 : vector<1x1024xi32>
    %c16_i32 = arith.constant 16 : i32
    %16 = vector.broadcast %c16_i32 : i32 to vector<1x1024xi32>
    %17 = arith.shrui %15, %16 : vector<1x1024xi32>
    %18 = arith.xori %15, %17 : vector<1x1024xi32>
    %c2146121005_i32 = arith.constant 2146121005 : i32
    %19 = vector.broadcast %c2146121005_i32 : i32 to vector<1x1024xi32>
    %20 = arith.muli %18, %19 : vector<1x1024xi32>
    %c15_i32 = arith.constant 15 : i32
    %21 = vector.broadcast %c15_i32 : i32 to vector<1x1024xi32>
    %22 = arith.shrui %20, %21 : vector<1x1024xi32>
    %23 = arith.xori %20, %22 : vector<1x1024xi32>
    %c-2073254261_i32 = arith.constant -2073254261 : i32
    %24 = vector.broadcast %c-2073254261_i32 : i32 to vector<1x1024xi32>
    %25 = arith.muli %23, %24 : vector<1x1024xi32>
    %c16_i32_0 = arith.constant 16 : i32
    %26 = vector.broadcast %c16_i32_0 : i32 to vector<1x1024xi32>
    %27 = arith.shrui %25, %26 : vector<1x1024xi32>
    %28 = arith.xori %25, %27 : vector<1x1024xi32>
    %c-2147483648_i32 = arith.constant -2147483648 : i32
    %29 = vector.broadcast %c-2147483648_i32 : i32 to vector<1x1024xi32>
    %30 = arith.cmpi ult, %28, %29 : vector<1x1024xi32>
    %c0_1 = arith.constant 0 : index
    %c0_2 = arith.constant 0 : index
    %31 = vector.load %arg2[%c0_1, %c0_2] : memref<1x1024xf32, #tpu.memory_space<vmem>>, vector<1x1024xf32>
    %cst = arith.constant 2.000000e+00 : f32
    %32 = vector.broadcast %cst : f32 to vector<1x1024xf32>
    %33 = arith.mulf %31, %32 : vector<1x1024xf32>
    %cst_3 = arith.constant 0.000000e+00 : f32
    %34 = vector.broadcast %cst_3 : f32 to vector<1x1024xf32>
    %35 = arith.select %30, %33, %34 : vector<1x1024xi1>, vector<1x1024xf32>
    %c0_4 = arith.constant 0 : index
    %c0_5 = arith.constant 0 : index
    %36 = vector.load %arg3[%c0_4, %c0_5] : memref<1x1024xf32, #tpu.memory_space<vmem>>, vector<1x1024xf32>
    tpu.vector_store %arg3[%c0_4, %c0_5], %35 {strides = array<i32>} : memref<1x1024xf32, #tpu.memory_space<vmem>>, vector<1x1024xf32>,
    return
  }
  func.func @transform_0(%arg0: i32) -> i32 {
    %c0_i32 = arith.constant 0 : i32
    %c0_i32_0 = arith.constant 0 : i32
    return %c0_i32 : i32
  }
  func.func @transform_1(%arg0: i32) -> (i32, i32) {
    %c0_i32 = arith.constant 0 : i32
    %c0_i32_0 = arith.constant 0 : i32
    return %arg0, %c0_i32 : i32, i32
  }
  func.func @transform_2(%arg0: i32) -> (i32, i32) {
    %c0_i32 = arith.constant 0 : i32
    %c0_i32_0 = arith.constant 0 : i32
    return %arg0, %c0_i32 : i32, i32
  }
}

</mosaic_0001>

<llo_original>
// kernel: _fraternal_apply.1
$region0: #{_fraternal_apply.1}
  #allocation0 [shape = 'u32[]', space=smem, size = 0x4, offset = 0x4, fixed_abs, tag = 'smem constant byte address 0x4 - core index']
  #allocation1 [shape = 'u32[144,128]{1,0:T(1,128)}', space=vmem, size = 0x12000, scoped, tag = 'internal scratch']
  #allocation2 [shape = 's32[1]{0:T(128)S(6)}', space=smem, size = 0x200, scoped, tag = 'scoped memory for _fraternal_apply.1']
  %s0 = inlined_call_operand.<no memory space> [shape: s32[1], index: 0, kind: input, shape index: {}]
  %s1 = inlined_call_operand.vmem [shape: f32[1,1024], index: 1, kind: input, shape index: {}]
  %s2 = inlined_call_operand.vmem [shape: f32[1,1024], index: 2, kind: output, shape index: {}]
  %s3 = sld [smem:[#allocation0]]
  $region18: #{_fraternal_apply.1} parent=0
    _
  %s5 = ssub.s32 1, %s3
  %s6 = scalar_select 0, %s5, %s3
  %7 = sst [smem:[#allocation2]] %s0
  // Predicated region
  $region2: #{_fraternal_apply.1} parent=0 // pred_check
    _
  $region3: #{_fraternal_apply.1} parent=0 // pred_check_branch
    %9 = sbr.rel (0) target = $region5
  $region4: #{_fraternal_apply.1} parent=0 // pred_region
    _
  $region5: #{_fraternal_apply.1} parent=0 // pred_fallthru
    _
  // Predicated region
  $region6: #{_fraternal_apply.1} parent=0 // pred_check
    _
  $region7: #{_fraternal_apply.1} parent=0 // pred_check_branch
    %11 = sbr.rel (0) target = $region9
  $region8: #{_fraternal_apply.1} parent=0 // pred_region
    _
  $region9: #{_fraternal_apply.1} parent=0 // pred_fallthru
    _
  %v12 = vlaneseq
  %v13 = vshrl.u32 %v12, 7
  %v14 = vstv 0
  %v15 = vadd.s32 %v13, %v14
  %v16 = vlaneseq
  %v17 = vand.u32 %v16, 127
  %v18 = vadd.s32 %v17, 128
  %v19 = vadd.s32 %v17, 256
  %v20 = vadd.s32 %v17, 384
  %v21 = vadd.s32 %v17, 512
  %v22 = vadd.s32 %v17, 640
  %v23 = vadd.s32 %v17, 768
  %v24 = vadd.s32 %v17, 896
  %v25 = vmul.u32 %v15, 1024
  %v26 = vadd.s32 %v25, %v17
  %v27 = vadd.s32 %v25, %v18
  %v28 = vadd.s32 %v25, %v19
  %v29 = vadd.s32 %v25, %v20
  %v30 = vadd.s32 %v25, %v21
  %v31 = vadd.s32 %v25, %v22
  %v32 = vadd.s32 %v25, %v23
  %v33 = vadd.s32 %v25, %v24
  %s34 = sld [smem:[#allocation2]]
  %v35 = vmul.u32 %v26, 2654435769
  %v36 = vmul.u32 %v27, 2654435769
  %v37 = vmul.u32 %v28, 2654435769
  %v38 = vmul.u32 %v29, 2654435769
  %v39 = vmul.u32 %v30, 2654435769
  %v40 = vmul.u32 %v31, 2654435769
  %v41 = vmul.u32 %v32, 2654435769
  %v42 = vmul.u32 %v33, 2654435769
  %s43 = smul.u32 %s34, 2246822507
  %v44 = vstv %s43
  %v45 = vadd.s32 %v35, %v44
  %v46 = vadd.s32 %v36, %v44
  %v47 = vadd.s32 %v37, %v44
  %v48 = vadd.s32 %v38, %v44
  %v49 = vadd.s32 %v39, %v44
  %v50 = vadd.s32 %v40, %v44
  %v51 = vadd.s32 %v41, %v44
  %v52 = vadd.s32 %v42, %v44
  %v53 = vadd.s32 %v45, 1779033703
  %v54 = vadd.s32 %v46, 1779033703
  %v55 = vadd.s32 %v47, 1779033703
  %v56 = vadd.s32 %v48, 1779033703
  %v57 = vadd.s32 %v49, 1779033703
  %v58 = vadd.s32 %v50, 1779033703
  %v59 = vadd.s32 %v51, 1779033703
  %v60 = vadd.s32 %v52, 1779033703
  %v61 = vshrl.u32 %v53, 16
  %v62 = vshrl.u32 %v54, 16
  %v63 = vshrl.u32 %v55, 16
  %v64 = vshrl.u32 %v56, 16
  %v65 = vshrl.u32 %v57, 16
  %v66 = vshrl.u32 %v58, 16
  %v67 = vshrl.u32 %v59, 16
  %v68 = vshrl.u32 %v60, 16
  %v69 = vxor.u32 %v53, %v61
  %v70 = vxor.u32 %v54, %v62
  %v71 = vxor.u32 %v55, %v63
  %v72 = vxor.u32 %v56, %v64
  %v73 = vxor.u32 %v57, %v65
  %v74 = vxor.u32 %v58, %v66
  %v75 = vxor.u32 %v59, %v67
  %v76 = vxor.u32 %v60, %v68
  %v77 = vmul.u32 %v69, 2146121005
  %v78 = vmul.u32 %v70, 2146121005
  %v79 = vmul.u32 %v71, 2146121005
  %v80 = vmul.u32 %v72, 2146121005
  %v81 = vmul.u32 %v73, 2146121005
  %v82 = vmul.u32 %v74, 2146121005
  %v83 = vmul.u32 %v75, 2146121005
  %v84 = vmul.u32 %v76, 2146121005
  %v85 = vshrl.u32 %v77, 15
  %v86 = vshrl.u32 %v78, 15
  %v87 = vshrl.u32 %v79, 15
  %v88 = vshrl.u32 %v80, 15
  %v89 = vshrl.u32 %v81, 15
  %v90 = vshrl.u32 %v82, 15
  %v91 = vshrl.u32 %v83, 15
  %v92 = vshrl.u32 %v84, 15
  %v93 = vxor.u32 %v77, %v85
  %v94 = vxor.u32 %v78, %v86
  %v95 = vxor.u32 %v79, %v87
  %v96 = vxor.u32 %v80, %v88
  %v97 = vxor.u32 %v81, %v89
  %v98 = vxor.u32 %v82, %v90
  %v99 = vxor.u32 %v83, %v91
  %v100 = vxor.u32 %v84, %v92
  %v101 = vmul.u32 %v93, 2221713035
  %v102 = vmul.u32 %v94, 2221713035
  %v103 = vmul.u32 %v95, 2221713035
  %v104 = vmul.u32 %v96, 2221713035
  %v105 = vmul.u32 %v97, 2221713035
  %v106 = vmul.u32 %v98, 2221713035
  %v107 = vmul.u32 %v99, 2221713035
  %v108 = vmul.u32 %v100, 2221713035
  %v109 = vshrl.u32 %v101, 16
  %v110 = vshrl.u32 %v102, 16
  %v111 = vshrl.u32 %v103, 16
  %v112 = vshrl.u32 %v104, 16
  %v113 = vshrl.u32 %v105, 16
  %v114 = vshrl.u32 %v106, 16
  %v115 = vshrl.u32 %v107, 16
  %v116 = vshrl.u32 %v108, 16
  %v117 = vxor.u32 %v101, %v109
  %v118 = vxor.u32 %v102, %v110
  %v119 = vxor.u32 %v103, %v111
  %v120 = vxor.u32 %v104, %v112
  %v121 = vxor.u32 %v105, %v113
  %v122 = vxor.u32 %v106, %v114
  %v123 = vxor.u32 %v107, %v115
  %v124 = vxor.u32 %v108, %v116
  %vm125 = vcmp.lt.u32.totalorder %v117, 2147483648
  %vm126 = vcmp.lt.u32.totalorder %v118, 2147483648
  %vm127 = vcmp.lt.u32.totalorder %v119, 2147483648
  %vm128 = vcmp.lt.u32.totalorder %v120, 2147483648
  %vm129 = vcmp.lt.u32.totalorder %v121, 2147483648
  %vm130 = vcmp.lt.u32.totalorder %v122, 2147483648
  %vm131 = vcmp.lt.u32.totalorder %v123, 2147483648
  %vm132 = vcmp.lt.u32.totalorder %v124, 2147483648
  %v133 = vld [vmem:[%s1] sm:$0xff]
  %v134 = vmul.f32 %v133, 2.0
  %v136 = vlaneseq
  %v137 = vshrl.u32 %v136, 7
  %v138 = vsub.s32 0, %v137
  %v139 = vrot.slane %v134, %v138
  %v140 = vlaneseq
  %v141 = vshrl.u32 %v140, 7
  %v142 = vsub.s32 1, %v141
  %v143 = vrot.slane %v134, %v142
  %v144 = vlaneseq
  %v145 = vshrl.u32 %v144, 7
  %v146 = vsub.s32 2, %v145
  %v147 = vrot.slane %v134, %v146
  %v148 = vlaneseq
  %v149 = vshrl.u32 %v148, 7
  %v150 = vsub.s32 3, %v149
  %v151 = vrot.slane %v134, %v150
  %v152 = vlaneseq
  %v153 = vshrl.u32 %v152, 7
  %v154 = vsub.s32 4, %v153
  %v155 = vrot.slane %v134, %v154
  %v156 = vlaneseq
  %v157 = vshrl.u32 %v156, 7
  %v158 = vsub.s32 5, %v157
  %v159 = vrot.slane %v134, %v158
  %v160 = vlaneseq
  %v161 = vshrl.u32 %v160, 7
  %v162 = vsub.s32 6, %v161
  %v163 = vrot.slane %v134, %v162
  %v164 = vlaneseq
  %v165 = vshrl.u32 %v164, 7
  %v166 = vsub.s32 7, %v165
  %v167 = vrot.slane %v134, %v166
  %v176 = vsel %vm125, %v139, 0.0
  %v177 = vsel %vm126, %v143, 0.0
  %v178 = vsel %vm127, %v147, 0.0
  %v179 = vsel %vm128, %v151, 0.0
  %v180 = vsel %vm129, %v155, 0.0
  %v181 = vsel %vm130, %v159, 0.0
  %v182 = vsel %vm131, %v163, 0.0
  %v183 = vsel %vm132, %v167, 0.0
  %v192 = vcombine.low %v176, %v177
  %v193 = vcombine.low %v178, %v179
  %v194 = vcombine.low %v180, %v181
  %v195 = vcombine.low %v182, %v183
  %v197 = vunpack.c.l.s4 1966171168
  %v198 = vunpack.c.0.s8 %v197
  %v199 = vlaneseq
  %v200 = vshrl.u32 %v199, 7
  %v201 = vsub.s32 %v198, %v200
  %v202 = vrot.slane %v192, %v201
  %v204 = vunpack.c.l.s4 1966171168
  %v205 = vunpack.c.0.s8 %v204
  %v206 = vlaneseq
  %v207 = vshrl.u32 %v206, 7
  %v208 = vsub.s32 %v205, %v207
  %v209 = vrot.slane %v193, %v208
  %v211 = vunpack.c.l.s4 1966171168
  %v212 = vunpack.c.0.s8 %v211
  %v213 = vlaneseq
  %v214 = vshrl.u32 %v213, 7
  %v215 = vsub.s32 %v212, %v214
  %v216 = vrot.slane %v194, %v215
  %v218 = vunpack.c.l.s4 1966171168
  %v219 = vunpack.c.0.s8 %v218
  %v220 = vlaneseq
  %v221 = vshrl.u32 %v220, 7
  %v222 = vsub.s32 %v219, %v221
  %v223 = vrot.slane %v195, %v222
  %v224 = vcombine.low %v202, %v209
  %v225 = vcombine.low %v216, %v223
  %v227 = vunpack.c.l.s4 1966171168
  %v228 = vunpack.c.0.s8 %v227
  %v229 = vlaneseq
  %v230 = vshrl.u32 %v229, 7
  %v231 = vsub.s32 %v228, %v230
  %v232 = vrot.slane %v224, %v231
  %v234 = vunpack.c.l.s4 1966171168
  %v235 = vunpack.c.0.s8 %v234
  %v236 = vlaneseq
  %v237 = vshrl.u32 %v236, 7
  %v238 = vsub.s32 %v235, %v237
  %v239 = vrot.slane %v225, %v238
  %v240 = vcombine.low %v232, %v239
  %242 = vst [vmem:[%s2] sm:$0xff] %v240
  // Predicated region
  $region10: #{_fraternal_apply.1} parent=0 // pred_check
    _
  $region11: #{_fraternal_apply.1} parent=0 // pred_check_branch
    %244 = sbr.rel (0) target = $region13
  $region12: #{_fraternal_apply.1} parent=0 // pred_region
    _
  $region13: #{_fraternal_apply.1} parent=0 // pred_fallthru
    _
  // Predicated region
  $region14: #{_fraternal_apply.1} parent=0 // pred_check
    _
  $region15: #{_fraternal_apply.1} parent=0 // pred_check_branch
    %246 = sbr.rel (0) target = $region17
  $region16: #{_fraternal_apply.1} parent=0 // pred_region
    _
  $region17: #{_fraternal_apply.1} parent=0 // pred_fallthru
    _

</llo_original>
